<compile_context>
chip_gen: v6e
topology: v6e:2x2x1
jax: 0.10.0
libtpu: 0.0.40
codegen_flags: <defaults>
</compile_context>

<pallas_src>
import functools
import math

import jax
import jax.numpy as jnp
import numpy as np
from jax.experimental import pallas as pl
from jax.experimental.pallas import tpu as pltpu

BCE_POS_WEIGHT = 20.0  # Tacotron2Loss.__init__ default


def _taco2_loss_kernel(olens_ref, ys_ref, after_ref, before_ref,
                       logits_ref, labels_ref, out_ref, *,
                       odim, bce_pos_weight):
    """Per-(batch, seq-tile) partial sums for masked MSE + weighted BCE.

    olens_ref : (B,) int32 scalar-prefetch (SMEM)
    ys/after/before refs : (1, rows_tile, W) lane-dense mel tiles (W = k*odim)
    logits/labels refs   : (1, 1, L_TILE)
    out_ref              : (1, 1, 8, 128); sublane 0 = sse, sublane 1 = bce_num
    """
    b = pl.program_id(0)
    l = pl.program_id(1)
    rows_tile, w = ys_ref.shape[1], ys_ref.shape[2]
    l_tile = logits_ref.shape[2]

    olen = olens_ref[b]

    # ---- fused, masked sum of squared errors for this tile ------------------
    y = ys_ref[0]
    da = after_ref[0] - y
    db = before_ref[0] - y
    sq = da * da + db * db                              # fused: single reduce

    row = jax.lax.broadcasted_iota(jnp.int32, (rows_tile, w), 0)
    lane = jax.lax.broadcasted_iota(jnp.int32, (rows_tile, w), 1)
    # flat element index within this batch item's (Lmax_pad * odim) space;
    # element belongs to a valid frame iff flat < olen * odim (no division).
    flat = (l * rows_tile + row) * w + lane
    feat_mask = (flat < olen * odim).astype(jnp.float32)
    sse = jnp.sum(sq * feat_mask)

    # ---- masked, weighted BCE-with-logits numerator --------------------------
    x = logits_ref[0]                                   # (1, l_tile)
    t = labels_ref[0]
    frame = jax.lax.broadcasted_iota(jnp.int32, (1, l_tile), 1) + l * l_tile
    frame_mask = (frame < olen).astype(jnp.float32)
    wgt = jnp.where(t == 1.0, jnp.float32(bce_pos_weight), jnp.float32(1.0))
    per = jnp.maximum(x, 0.0) - x * t + jnp.log1p(jnp.exp(-jnp.abs(x)))
    bce_num = jnp.sum(frame_mask * wgt * per)

    # ---- lane-dense partial-sum tile: sublane 0 = sse, others = bce_num ------
    out_row = jax.lax.broadcasted_iota(jnp.int32, (8, 128), 0)
    out_ref[0, 0] = jnp.where(out_row == 0, sse, bce_num)


def tacotron2_loss(after_outs, before_outs, logits, ys, labels, olens,
                   *, bce_pos_weight=BCE_POS_WEIGHT, l_tile=1024):
    """Mirrors Tacotron2Loss.forward (use_masking=True, olens given).

    Returns (loss, mse_loss, bce_loss) as float32 scalars.
    """
    B, Lmax, odim = ys.shape

    # Lane-dense repack: k frames per VMEM row so k*odim % 128 == 0 (f32 lanes).
    k = 128 // math.gcd(128, odim)
    if k > 32:   # awkward odim -> flattening would force huge tiles; keep frame-major
        k = 1
    w = k * odim
    gran = max(128, 8 * k)                     # tile granularity in frames
    l_tile = max(gran, (int(l_tile) // gran) * gran)
    l_tile = min(l_tile, int(pl.cdiv(Lmax, gran)) * gran)
    nl = int(pl.cdiv(Lmax, l_tile))
    lmax_pad = nl * l_tile
    rows_tile = l_tile // k
    rows_total = lmax_pad // k
    pad = lmax_pad - Lmax

    def _pad_mel(a):
        a = a.astype(jnp.float32)
        if pad:
            a = jnp.pad(a, ((0, 0), (0, pad), (0, 0)))   # zero-pad -> masked out
        return a.reshape(B, rows_total, w)

    def _pad_vec(a):
        a = a.astype(jnp.float32)
        if pad:
            a = jnp.pad(a, ((0, 0), (0, pad)))
        return a.reshape(B, 1, lmax_pad)

    ys_p = _pad_mel(ys)
    after_p = _pad_mel(after_outs)
    before_p = _pad_mel(before_outs)
    logits_p = _pad_vec(logits)
    labels_p = _pad_vec(labels)
    olens_i = olens.reshape(-1).astype(jnp.int32)

    mel_spec = pl.BlockSpec((1, rows_tile, w), lambda b, l, olens: (b, l, 0))
    vec_spec = pl.BlockSpec((1, 1, l_tile), lambda b, l, olens: (b, 0, l))

    kernel = functools.partial(_taco2_loss_kernel, odim=odim,
                               bce_pos_weight=float(bce_pos_weight))

    partials = pl.pallas_call(
        kernel,
        out_shape=jax.ShapeDtypeStruct((B, nl, 8, 128), jnp.float32),
        grid_spec=pltpu.PrefetchScalarGridSpec(
            num_scalar_prefetch=1,
            grid=(B, nl),
            in_specs=[mel_spec, mel_spec, mel_spec, vec_spec, vec_spec],
            out_specs=pl.BlockSpec((1, 1, 8, 128),
                                   lambda b, l, olens: (b, l, 0, 0)),
        ),
        compiler_params=pltpu.CompilerParams(
            dimension_semantics=("parallel", "parallel")),
    )(olens_i, ys_p, after_p, before_p, logits_p, labels_p)

    # Tiny final reduction + divides outside the kernel (scalar path).
    # Note: all-zero olens divides by zero (NaN), same as the PyTorch reference.
    n_frames = jnp.sum(jnp.minimum(olens_i, Lmax)).astype(jnp.float32)
    sse_total = jnp.sum(partials[:, :, 0, 0])
    bce_num_total = jnp.sum(partials[:, :, 1, 0])
    mse_loss = sse_total / (n_frames * jnp.float32(odim))
    bce_loss = bce_num_total / n_frames
    loss = mse_loss + bce_loss
    return loss, mse_loss, bce_loss


def _reference_loss(after_outs, before_outs, logits, ys, labels, olens):
    """Pure-JAX reference implementing the PyTorch semantics for validation."""
    B, Lmax, odim = ys.shape
    mask2 = (jnp.arange(Lmax)[None, :] < olens[:, None]).astype(jnp.float32)
    n_frames = jnp.sum(mask2)
    n_feat = n_frames * odim
    sse_a = jnp.sum(((after_outs - ys) ** 2) * mask2[:, :, None])
    sse_b = jnp.sum(((before_outs - ys) ** 2) * mask2[:, :, None])
    mse = sse_a / n_feat + sse_b / n_feat
    wgt = jnp.where(labels == 1.0, BCE_POS_WEIGHT, 1.0)
    per = jnp.maximum(logits, 0.0) - logits * labels + jnp.log1p(jnp.exp(-jnp.abs(logits)))
    bce = jnp.sum(mask2 * wgt * per) / n_frames
    return mse + bce, mse, bce


if __name__ == "__main__":
    key = jax.random.PRNGKey(0)
    B, Lmax, odim = 2, 8, 16

    k1, k2, k3, k4 = jax.random.split(key, 4)
    ys = jax.random.normal(k1, (B, Lmax, odim), dtype=jnp.float32)
    after_outs = jax.random.normal(k2, (B, Lmax, odim), dtype=jnp.float32)
    before_outs = jax.random.normal(k3, (B, Lmax, odim), dtype=jnp.float32)
    logits = jax.random.normal(k4, (B, Lmax), dtype=jnp.float32)

    olens = jnp.array([8, 5], dtype=jnp.int32)
    # stop-token labels: 1 at the last valid frame, 0 elsewhere
    labels_np = np.zeros((B, Lmax), dtype=np.float32)
    for i, ln in enumerate(np.asarray(olens)):
        labels_np[i, int(ln) - 1] = 1.0
    labels = jnp.asarray(labels_np)

    loss, mse_loss, bce_loss = tacotron2_loss(
        after_outs, before_outs, logits, ys, labels, olens)
    jax.block_until_ready(loss)

    ref_loss, ref_mse, ref_bce = _reference_loss(
        after_outs, before_outs, logits, ys, labels, olens)
    np.testing.assert_allclose(np.asarray(loss), np.asarray(ref_loss), rtol=1e-5, atol=1e-5)
    np.testing.assert_allclose(np.asarray(mse_loss), np.asarray(ref_mse), rtol=1e-5, atol=1e-5)
    np.testing.assert_allclose(np.asarray(bce_loss), np.asarray(ref_bce), rtol=1e-5, atol=1e-5)

    print("KERNEL_OK")
</pallas_src>

<mosaic_0001>
module attributes {stable_mosaic.version = 11 : i64} {
  func.func @_taco2_loss_kernel(%arg0: i32, %arg1: i32, %arg2: memref<2xi32, #tpu.memory_space<smem>>, %arg3: memref<1x16x128xf32, #tpu.memory_space<vmem>>, %arg4: memref<1x16x128xf32, #tpu.memory_space<vmem>>, %arg5: memref<1x16x128xf32, #tpu.memory_space<vmem>>, %arg6: memref<1x1x128xf32, #tpu.memory_space<vmem>>, %arg7: memref<1x1x128xf32, #tpu.memory_space<vmem>>, %arg8: memref<1x1x8x128xf32, #tpu.memory_space<vmem>>) attributes {dimension_semantics = [#tpu.dimension_semantics<parallel>, #tpu.dimension_semantics<parallel>], iteration_bounds = array<i64: 2, 1>, scalar_prefetch = 1 : i64, scratch_operands = 0 : i64, tpu.core_type = #tpu.core_type<tc>, window_params = [{transform_indices = @transform_0, window_bounds = array<i64: 1, 16, 128>}, {transform_indices = @transform_1, window_bounds = array<i64: 1, 16, 128>}, {transform_indices = @transform_2, window_bounds = array<i64: 1, 16, 128>}, {transform_indices = @transform_3, window_bounds = array<i64: 1, 1, 128>}, {transform_indices = @transform_4, window_bounds = array<i64: 1, 1, 128>}, {transform_indices = @transform_5, window_bounds = array<i64: 1, 1, 8, 128>}]} {
    %0 = arith.index_cast %arg0 : i32 to index
    %1 = memref.load %arg2[%0] : memref<2xi32, #tpu.memory_space<smem>>
    %c0 = arith.constant 0 : index
    %c0_0 = arith.constant 0 : index
    %c0_1 = arith.constant 0 : index
    %2 = vector.load %arg3[%c0, %c0_0, %c0_1] : memref<1x16x128xf32, #tpu.memory_space<vmem>>, vector<1x16x128xf32>
    %3 = vector.shape_cast %2 : vector<1x16x128xf32> to vector<16x128xf32>
    %c0_2 = arith.constant 0 : index
    %c0_3 = arith.constant 0 : index
    %c0_4 = arith.constant 0 : index
    %4 = vector.load %arg4[%c0_2, %c0_3, %c0_4] : memref<1x16x128xf32, #tpu.memory_space<vmem>>, vector<1x16x128xf32>
    %5 = vector.shape_cast %4 : vector<1x16x128xf32> to vector<16x128xf32>
    %6 = arith.subf %5, %3 : vector<16x128xf32>
    %c0_5 = arith.constant 0 : index
    %c0_6 = arith.constant 0 : index
    %c0_7 = arith.constant 0 : index
    %7 = vector.load %arg5[%c0_5, %c0_6, %c0_7] : memref<1x16x128xf32, #tpu.memory_space<vmem>>, vector<1x16x128xf32>
    %8 = vector.shape_cast %7 : vector<1x16x128xf32> to vector<16x128xf32>
    %9 = arith.subf %8, %3 : vector<16x128xf32>
    %10 = arith.mulf %6, %6 : vector<16x128xf32>
    %11 = arith.mulf %9, %9 : vector<16x128xf32>
    %12 = arith.addf %10, %11 : vector<16x128xf32>
    %13 = tpu.iota {dimensions = array<i32: 0>} : vector<16x128xi32>
    %14 = tpu.iota {dimensions = array<i32: 1>} : vector<16x128xi32>
    %c16_i32 = arith.constant 16 : i32
    %15 = arith.muli %arg1, %c16_i32 : i32
    %16 = vector.broadcast %15 : i32 to vector<16x128xi32>
    %17 = arith.addi %16, %13 : vector<16x128xi32>
    %c128_i32 = arith.constant 128 : i32
    %18 = vector.broadcast %c128_i32 : i32 to vector<16x128xi32>
    %19 = arith.muli %17, %18 : vector<16x128xi32>
    %20 = arith.addi %19, %14 : vector<16x128xi32>
    %c16_i32_8 = arith.constant 16 : i32
    %21 = arith.muli %1, %c16_i32_8 : i32
    %22 = vector.broadcast %21 : i32 to vector<16x128xi32>
    %23 = arith.cmpi slt, %20, %22 : vector<16x128xi32>
    %24 = arith.extui %23 : vector<16x128xi1> to vector<16x128xi32>
    %25 = arith.sitofp %24 : vector<16x128xi32> to vector<16x128xf32>
    %26 = arith.mulf %12, %25 : vector<16x128xf32>
    %27 = vector.shape_cast %26 : vector<16x128xf32> to vector<1x16x128xf32>
    %cst = arith.constant dense<0.000000e+00> : vector<1xf32>
    %28 = vector.multi_reduction <add>, %27, %cst [1, 2] : vector<1x16x128xf32> to vector<1xf32>
    %29 = vector.shape_cast %28 : vector<1xf32> to vector<1x1x1xf32>
    %30 = vector.extract %29[0, 0, 0] : f32 from vector<1x1x1xf32>
    %c0_9 = arith.constant 0 : index
    %c0_10 = arith.constant 0 : index
    %c0_11 = arith.constant 0 : index
    %31 = vector.load %arg6[%c0_9, %c0_10, %c0_11] : memref<1x1x128xf32, #tpu.memory_space<vmem>>, vector<1x1x128xf32>
    %32 = vector.shape_cast %31 : vector<1x1x128xf32> to vector<1x128xf32>
    %c0_12 = arith.constant 0 : index
    %c0_13 = arith.constant 0 : index
    %c0_14 = arith.constant 0 : index
    %33 = vector.load %arg7[%c0_12, %c0_13, %c0_14] : memref<1x1x128xf32, #tpu.memory_space<vmem>>, vector<1x1x128xf32>
    %34 = vector.shape_cast %33 : vector<1x1x128xf32> to vector<1x128xf32>
    %35 = tpu.iota {dimensions = array<i32: 1>} : vector<1x128xi32>
    %c128_i32_15 = arith.constant 128 : i32
    %36 = arith.muli %arg1, %c128_i32_15 : i32
    %37 = vector.broadcast %36 : i32 to vector<1x128xi32>
    %38 = arith.addi %35, %37 : vector<1x128xi32>
    %39 = vector.broadcast %1 : i32 to vector<1x128xi32>
    %40 = arith.cmpi slt, %38, %39 : vector<1x128xi32>
    %41 = arith.extui %40 : vector<1x128xi1> to vector<1x128xi32>
    %42 = arith.sitofp %41 : vector<1x128xi32> to vector<1x128xf32>
    %cst_16 = arith.constant 1.000000e+00 : f32
    %43 = vector.broadcast %cst_16 : f32 to vector<1x128xf32>
    %44 = arith.cmpf oeq, %34, %43 : vector<1x128xf32>
    %cst_17 = arith.constant 2.000000e+01 : f32
    %cst_18 = arith.constant 1.000000e+00 : f32
    %45 = vector.broadcast %cst_17 : f32 to vector<1x128xf32>
    %46 = vector.broadcast %cst_18 : f32 to vector<1x128xf32>
    %47 = arith.select %44, %45, %46 : vector<1x128xi1>, vector<1x128xf32>
    %cst_19 = arith.constant 0.000000e+00 : f32
    %48 = vector.broadcast %cst_19 : f32 to vector<1x128xf32>
    %49 = arith.maximumf %32, %48 : vector<1x128xf32>
    %50 = arith.mulf %32, %34 : vector<1x128xf32>
    %51 = arith.subf %49, %50 : vector<1x128xf32>
    %52 = math.absf %32 : vector<1x128xf32>
    %cst_20 = arith.constant 0.000000e+00 : f32
    %53 = vector.broadcast %cst_20 : f32 to vector<1x128xf32>
    %54 = arith.subf %53, %52 : vector<1x128xf32>
    %55 = math.exp %54 : vector<1x128xf32>
    %56 = math.log1p %55 : vector<1x128xf32>
    %57 = arith.addf %51, %56 : vector<1x128xf32>
    %58 = arith.mulf %42, %47 : vector<1x128xf32>
    %59 = arith.mulf %58, %57 : vector<1x128xf32>
    %60 = vector.shape_cast %59 : vector<1x128xf32> to vector<1x1x128xf32>
    %cst_21 = arith.constant dense<0.000000e+00> : vector<1xf32>
    %61 = vector.multi_reduction <add>, %60, %cst_21 [1, 2] : vector<1x1x128xf32> to vector<1xf32>
    %62 = vector.shape_cast %61 : vector<1xf32> to vector<1x1x1xf32>
    %63 = vector.extract %62[0, 0, 0] : f32 from vector<1x1x1xf32>
    %64 = tpu.iota {dimensions = array<i32: 0>} : vector<8x128xi32>
    %c0_i32 = arith.constant 0 : i32
    %65 = vector.broadcast %c0_i32 : i32 to vector<8x128xi32>
    %66 = arith.cmpi eq, %64, %65 : vector<8x128xi32>
    %67 = vector.broadcast %30 : f32 to vector<8x128xf32>
    %68 = vector.broadcast %63 : f32 to vector<8x128xf32>
    %69 = arith.select %66, %67, %68 : vector<8x128xi1>, vector<8x128xf32>
    %c0_22 = arith.constant 0 : index
    %c0_23 = arith.constant 0 : index
    %c0_24 = arith.constant 0 : index
    %c0_25 = arith.constant 0 : index
    %70 = vector.load %arg8[%c0_22, %c0_23, %c0_24, %c0_25] : memref<1x1x8x128xf32, #tpu.memory_space<vmem>>, vector<1x1x8x128xf32>
    %71 = vector.shape_cast %70 : vector<1x1x8x128xf32> to vector<8x128xf32>
    %72 = vector.shape_cast %69 : vector<8x128xf32> to vector<1x1x8x128xf32>
    tpu.vector_store %arg8[%c0_22, %c0_23, %c0_24, %c0_25], %72 {strides = array<i32>} : memref<1x1x8x128xf32, #tpu.memory_space<vmem>>, vector<1x1x8x128xf32>,
    return
  }
  func.func @transform_0(%arg0: i32, %arg1: i32, %arg2: memref<2xi32, #tpu.memory_space<smem>>) -> (i32, i32, i32) {
    %c0_i32 = arith.constant 0 : i32
    %c0_i32_0 = arith.constant 0 : i32
    return %arg0, %arg1, %c0_i32 : i32, i32, i32
  }
  func.func @transform_1(%arg0: i32, %arg1: i32, %arg2: memref<2xi32, #tpu.memory_space<smem>>) -> (i32, i32, i32) {
    %c0_i32 = arith.constant 0 : i32
    %c0_i32_0 = arith.constant 0 : i32
    return %arg0, %arg1, %c0_i32 : i32, i32, i32
  }
  func.func @transform_2(%arg0: i32, %arg1: i32, %arg2: memref<2xi32, #tpu.memory_space<smem>>) -> (i32, i32, i32) {
    %c0_i32 = arith.constant 0 : i32
    %c0_i32_0 = arith.constant 0 : i32
    return %arg0, %arg1, %c0_i32 : i32, i32, i32
  }
  func.func @transform_3(%arg0: i32, %arg1: i32, %arg2: memref<2xi32, #tpu.memory_space<smem>>) -> (i32, i32, i32) {
    %c0_i32 = arith.constant 0 : i32
    %c0_i32_0 = arith.constant 0 : i32
    return %arg0, %c0_i32, %arg1 : i32, i32, i32
  }
  func.func @transform_4(%arg0: i32, %arg1: i32, %arg2: memref<2xi32, #tpu.memory_space<smem>>) -> (i32, i32, i32) {
    %c0_i32 = arith.constant 0 : i32
    %c0_i32_0 = arith.constant 0 : i32
    return %arg0, %c0_i32, %arg1 : i32, i32, i32
  }
  func.func @transform_5(%arg0: i32, %arg1: i32, %arg2: memref<2xi32, #tpu.memory_space<smem>>) -> (i32, i32, i32, i32) {
    %c0_i32 = arith.constant 0 : i32
    %c0_i32_0 = arith.constant 0 : i32
    %c0_i32_1 = arith.constant 0 : i32
    return %arg0, %arg1, %c0_i32, %c0_i32_0 : i32, i32, i32, i32
  }
}

</mosaic_0001>

<llo_original>
// kernel: tpu_custom_call.1
$region0: #{tpu_custom_call.1}
  #allocation0 [shape = 'u32[]', space=smem, size = 0x4, offset = 0x4, fixed_abs, tag = 'smem constant byte address 0x4 - core index']
  #allocation1 [shape = 'u32[144,128]{1,0:T(1,128)}', space=vmem, size = 0x12000, scoped, tag = 'internal scratch']
  #allocation2 [shape = 's32[1]{0}', space=sflag, size = 0x4, scoped, tag = 'scoped memory for tpu_custom_call.1']
  #allocation3 [shape = 'u8[512]{0}', space=smem, size = 0x200, scoped, tag = 'prefetched SMEM operand 0']
  %s0 = inlined_call_operand.hbm [shape: s32[2], index: 0, kind: input, shape index: {}]
  %s1 = inlined_call_operand.hbm [shape: f32[2,16,128], index: 1, kind: input, shape index: {}]
  %s2 = inlined_call_operand.hbm [shape: f32[2,16,128], index: 2, kind: input, shape index: {}]
  %s3 = inlined_call_operand.hbm [shape: f32[2,16,128], index: 3, kind: input, shape index: {}]
  %s4 = inlined_call_operand.vmem [shape: f32[2,1,128], index: 4, kind: input, shape index: {}]
  %s5 = inlined_call_operand.vmem [shape: f32[2,1,128], index: 5, kind: input, shape index: {}]
  %s6 = inlined_call_operand.hbm [shape: f32[2,1,8,128], index: 6, kind: output, shape index: {}]
  %s7 = sld [smem:[#allocation0]]
  $region65: #{tpu_custom_call.1} parent=0
    _
  %s9 = ssub.s32 1, %s7
  %s10 = scalar_select 0, %s9, %s7
  %12 = dma.hbm_to_smem %s0, 16, [#allocation3], [#allocation2]
  %13 = dma.done [#allocation2], 16
  %14 = sfence
  $region1: #{tpu_custom_call.1} parent=0
    #allocation4 [shape = 'u8[16384]{0}', space=vmem, size = 0x4000, scoped, tag = 'input window, operand 1']
    #allocation5 [shape = 's32[2]{0}', space=sflag, size = 0x8, scoped, tag = 'scoped memory for tpu_custom_call.1']
    #allocation6 [shape = 's32[2]{0}', space=sflag, size = 0x8, scoped, tag = 'scoped memory for tpu_custom_call.1']
    #allocation7 [shape = 'u8[16384]{0}', space=vmem, size = 0x4000, scoped, tag = 'input window, operand 2']
    #allocation8 [shape = 's32[2]{0}', space=sflag, size = 0x8, scoped, tag = 'scoped memory for tpu_custom_call.1']
    #allocation9 [shape = 'u8[16384]{0}', space=vmem, size = 0x4000, scoped, tag = 'input window, operand 3']
    #allocation10 [shape = 'u8[8192]{0}', space=vmem, size = 0x2000, scoped, tag = 'output window, operand 0']
    %15 = vsyncpa [#allocation5], 0
    %s16 = scalar_lea.sflag [#allocation5], 1
    %17 = vsyncpa %s16, 0
    %18 = vsyncpa [#allocation8], 0
    %s19 = scalar_lea.sflag [#allocation8], 1
    %20 = vsyncpa %s19, 0
    %21 = vsyncpa [#allocation6], 0
    %s22 = scalar_lea.sflag [#allocation6], 1
    %23 = vsyncpa %s22, 0
    loop: start=0, step=1, limit=4
    $region2: #{tpu_custom_call.1} parent=1 // loop_pre_header
      _
    $region3: #{tpu_custom_call.1} parent=1 // loop_header
      %s25 = sphi 0, %s29
      %p26 = scmp.ge.s32.totalorder %s25, 4
      %s32 = sphi 0, %s44
      %s33 = sphi 0, %s40
      %s34 = sphi 0, %s32
      %s35 = sphi 0, %s33
      %s36 = sphi 0, %s34
      %s37 = sphi 0, %s35
      %s49 = sphi 0, %s51
      %s52 = sphi 0, %s49
      %s53 = sphi 0, %s52
      %s69 = sphi 0, %s53
      %s77 = sphi 0, %s79
      %s80 = sphi 0, %s77
      %s81 = sphi 0, %s80
      %s97 = sphi 0, %s81
      %s105 = sphi 0, %s107
      %s108 = sphi 0, %s105
      %s109 = sphi 0, %s108
      %s125 = sphi 0, %s109
      %s133 = sphi 0, %s135
      %s136 = sphi 0, %s133
      %s137 = sphi 0, %s136
      %s153 = sphi 0, %s137
      %s161 = sphi 0, %s163
      %s164 = sphi 0, %s161
      %s165 = sphi 0, %s164
      %s181 = sphi 0, %s165
      %s189 = sphi 0, %s191
      %s192 = sphi 0, %s189
      %s193 = sphi 0, %s192
      %s209 = sphi 0, %s193
    $region4: #{tpu_custom_call.1} parent=1 // loop_header_branch
      %28 = sbr.rel (%p26) target = $region8
    $region5: #{tpu_custom_call.1} parent=1 // loop_body
      %s30 = ssub.s32 %s25, 1
      %s31 = ssub.s32 %s25, 2
      %s38 = sadd.s32 1, %s33
      %p39 = scmp.ge.s32.totalorder %s38, 1
      %s40 = scalar_select %p39, 0, %s38
      %s41 = sadd.s32 1, %s32
      %s42 = scalar_select %p39, %s41, %s32
      %p43 = scmp.ge.s32.totalorder %s42, 2
      %s44 = scalar_select %p43, 0, %s42
      %s45 = ssub.s32 %s32, %s44
      %s46 = ssub.s32 %s33, %s40
      %s47 = sor.u32 %s45, %s46
      %p48 = scmp.eq.s32.totalorder %s47, 0
      %s50 = sadd.s32 %s49, 1
      %s51 = scalar_select %p48, %s49, %s50
      %p54 = pneg %p48
      %p55 = scmp.eq.s32.totalorder %s25, 1
      %p56 = por %p54, %p55
      %p57 = scmp.ne.s32.totalorder %s49, %s52
      %p58 = scmp.eq.s32.totalorder %s25, 0
      %p59 = por %p57, %p58
      %p60 = scmp.ne.s32.totalorder %s49, %s52
      %p61 = scmp.eq.s32.totalorder %s30, 1
      %p62 = por %p60, %p61
      %p63 = scmp.ne.s32.totalorder %s52, %s53
      %p64 = scmp.eq.s32.totalorder %s30, 0
      %p65 = por %p63, %p64
      %p66 = scmp.ne.s32.totalorder %s52, %s53
      %p67 = scmp.eq.s32.totalorder %s31, 1
      %p68 = por %p66, %p67
      %p70 = scmp.ne.s32.totalorder %s53, %s69
      %p71 = scmp.eq.s32.totalorder %s31, 0
      %p72 = por %p70, %p71
      %s73 = ssub.s32 %s32, %s44
      %s74 = ssub.s32 %s33, %s40
      %s75 = sor.u32 %s73, %s74
      %p76 = scmp.eq.s32.totalorder %s75, 0
      %s78 = sadd.s32 %s77, 1
      %s79 = scalar_select %p76, %s77, %s78
      %p82 = pneg %p76
      %p83 = scmp.eq.s32.totalorder %s25, 1
      %p84 = por %p82, %p83
      %p85 = scmp.ne.s32.totalorder %s77, %s80
      %p86 = scmp.eq.s32.totalorder %s25, 0
      %p87 = por %p85, %p86
      %p88 = scmp.ne.s32.totalorder %s77, %s80
      %p89 = scmp.eq.s32.totalorder %s30, 1
      %p90 = por %p88, %p89
      %p91 = scmp.ne.s32.totalorder %s80, %s81
      %p92 = scmp.eq.s32.totalorder %s30, 0
      %p93 = por %p91, %p92
      %p94 = scmp.ne.s32.totalorder %s80, %s81
      %p95 = scmp.eq.s32.totalorder %s31, 1
      %p96 = por %p94, %p95
      %p98 = scmp.ne.s32.totalorder %s81, %s97
      %p99 = scmp.eq.s32.totalorder %s31, 0
      %p100 = por %p98, %p99
      %s101 = ssub.s32 %s32, %s44
      %s102 = ssub.s32 %s33, %s40
      %s103 = sor.u32 %s101, %s102
      %p104 = scmp.eq.s32.totalorder %s103, 0
      %s106 = sadd.s32 %s105, 1
      %s107 = scalar_select %p104, %s105, %s106
      %p110 = pneg %p104
      %p111 = scmp.eq.s32.totalorder %s25, 1
      %p112 = por %p110, %p111
      %p113 = scmp.ne.s32.totalorder %s105, %s108
      %p114 = scmp.eq.s32.totalorder %s25, 0
      %p115 = por %p113, %p114
      %p116 = scmp.ne.s32.totalorder %s105, %s108
      %p117 = scmp.eq.s32.totalorder %s30, 1
      %p118 = por %p116, %p117
      %p119 = scmp.ne.s32.totalorder %s108, %s109
      %p120 = scmp.eq.s32.totalorder %s30, 0
      %p121 = por %p119, %p120
      %p122 = scmp.ne.s32.totalorder %s108, %s109
      %p123 = scmp.eq.s32.totalorder %s31, 1
      %p124 = por %p122, %p123
      %p126 = scmp.ne.s32.totalorder %s109, %s125
      %p127 = scmp.eq.s32.totalorder %s31, 0
      %p128 = por %p126, %p127
      %s129 = ssub.s32 %s32, %s44
      %s130 = ssub.s32 %s33, %s40
      %s131 = sor.u32 %s129, %s130
      %p132 = scmp.eq.s32.totalorder %s131, 0
      %s134 = sadd.s32 %s133, 1
      %s135 = scalar_select %p132, %s133, %s134
      %p138 = pneg %p132
      %p139 = scmp.eq.s32.totalorder %s25, 1
      %p140 = por %p138, %p139
      %p141 = scmp.ne.s32.totalorder %s133, %s136
      %p142 = scmp.eq.s32.totalorder %s25, 0
      %p143 = por %p141, %p142
      %p144 = scmp.ne.s32.totalorder %s133, %s136
      %p145 = scmp.eq.s32.totalorder %s30, 1
      %p146 = por %p144, %p145
      %p147 = scmp.ne.s32.totalorder %s136, %s137
      %p148 = scmp.eq.s32.totalorder %s30, 0
      %p149 = por %p147, %p148
      %p150 = scmp.ne.s32.totalorder %s136, %s137
      %p151 = scmp.eq.s32.totalorder %s31, 1
      %p152 = por %p150, %p151
      %p154 = scmp.ne.s32.totalorder %s137, %s153
      %p155 = scmp.eq.s32.totalorder %s31, 0
      %p156 = por %p154, %p155
      %s157 = ssub.s32 %s32, %s44
      %s158 = ssub.s32 %s33, %s40
      %s159 = sor.u32 %s157, %s158
      %p160 = scmp.eq.s32.totalorder %s159, 0
      %s162 = sadd.s32 %s161, 1
      %s163 = scalar_select %p160, %s161, %s162
      %p166 = pneg %p160
      %p167 = scmp.eq.s32.totalorder %s25, 1
      %p168 = por %p166, %p167
      %p169 = scmp.ne.s32.totalorder %s161, %s164
      %p170 = scmp.eq.s32.totalorder %s25, 0
      %p171 = por %p169, %p170
      %p172 = scmp.ne.s32.totalorder %s161, %s164
      %p173 = scmp.eq.s32.totalorder %s30, 1
      %p174 = por %p172, %p173
      %p175 = scmp.ne.s32.totalorder %s164, %s165
      %p176 = scmp.eq.s32.totalorder %s30, 0
      %p177 = por %p175, %p176
      %p178 = scmp.ne.s32.totalorder %s164, %s165
      %p179 = scmp.eq.s32.totalorder %s31, 1
      %p180 = por %p178, %p179
      %p182 = scmp.ne.s32.totalorder %s165, %s181
      %p183 = scmp.eq.s32.totalorder %s31, 0
      %p184 = por %p182, %p183
      %s185 = ssub.s32 %s32, %s44
      %s186 = ssub.s32 %s33, %s40
      %s187 = sor.u32 %s185, %s186
      %p188 = scmp.eq.s32.totalorder %s187, 0
      %s190 = sadd.s32 %s189, 1
      %s191 = scalar_select %p188, %s189, %s190
      %p194 = pneg %p188
      %p195 = scmp.eq.s32.totalorder %s25, 1
      %p196 = por %p194, %p195
      %p197 = scmp.ne.s32.totalorder %s189, %s192
      %p198 = scmp.eq.s32.totalorder %s25, 0
      %p199 = por %p197, %p198
      %p200 = scmp.ne.s32.totalorder %s189, %s192
      %p201 = scmp.eq.s32.totalorder %s30, 1
      %p202 = por %p200, %p201
      %p203 = scmp.ne.s32.totalorder %s192, %s193
      %p204 = scmp.eq.s32.totalorder %s30, 0
      %p205 = por %p203, %p204
      %p206 = scmp.ne.s32.totalorder %s192, %s193
      %p207 = scmp.eq.s32.totalorder %s31, 1
      %p208 = por %p206, %p207
      %p210 = scmp.ne.s32.totalorder %s193, %s209
      %p211 = scmp.eq.s32.totalorder %s31, 0
      %p212 = por %p210, %p211
      %p213 = scmp.le.s32.totalorder 1, %s25
      %p214 = scmp.lt.s32.totalorder %s25, 3
      %p215 = pnand %p213, %p214
      %p216 = pneg %p215
      // Predicated region
      $region9: #{tpu_custom_call.1} parent=5 // pred_check
        _
      $region10: #{tpu_custom_call.1} parent=5 // pred_check_branch
        %218 = sbr.rel (%p215) target = $region12
      $region11: #{tpu_custom_call.1} parent=5 // pred_region
        %s219 = ssub.s32 %s25, 1
      $region12: #{tpu_custom_call.1} parent=5 // pred_fallthru
        _
      %p220 = scmp.lt.s32.totalorder %s25, 2
      // Predicated region
      $region13: #{tpu_custom_call.1} parent=5 // pred_check
        %p221 = pneg %p220
      $region14: #{tpu_custom_call.1} parent=5 // pred_check_branch
        %223 = sbr.rel (%p221) target = $region16
      $region15: #{tpu_custom_call.1} parent=5 // pred_region
        // Predicated region
        $region17: #{tpu_custom_call.1} parent=15 // pred_check
          %p224 = pneg %p59
        $region18: #{tpu_custom_call.1} parent=15 // pred_check_branch
          %226 = sbr.rel (%p224) target = $region20
        $region19: #{tpu_custom_call.1} parent=15 // pred_region
          %s227 = sand.u32 %s49, 1
          %s228 = scalar_lea.sflag [#allocation5], %s227
          %s229 = sand.u32 %s49, 1
          %s230 = smul.addr %s229, 16
          %s231 = scalar_lea.vmem [#allocation4], %s230
          %s232 = smul.u32 2, %s33
          %s234 = ssub.s32 256, 256
          %235 = vsyncadd %s228, %s234
          %s236 = smul.addr %s32, 2
          %s237 = sadd.s32 %s232, %s236
          %s238 = smul.addr %s237, 128
          %s239 = scalar_lea.hbm %s1, %s238
          %s240 = sshll.u32 %s231, 4
          %s241 = int_to_ptr.vmem [resolvable:$true] %s240
          %246 = dma.hbm_to_vmem [thread:$0]  %s239, 256, %s241, %s228, 128, 128, 8
        $region20: #{tpu_custom_call.1} parent=15 // pred_fallthru
          _
        // Predicated region
        $region21: #{tpu_custom_call.1} parent=15 // pred_check
          %p247 = pneg %p87
        $region22: #{tpu_custom_call.1} parent=15 // pred_check_branch
          %249 = sbr.rel (%p247) target = $region24
        $region23: #{tpu_custom_call.1} parent=15 // pred_region
          %s250 = sand.u32 %s25, 1
          %s251 = scalar_lea.sflag [#allocation8], %s250
          %s252 = sand.u32 %s77, 1
          %s253 = smul.addr %s252, 16
          %s254 = scalar_lea.vmem [#allocation7], %s253
          %s255 = smul.u32 2, %s33
          %s257 = ssub.s32 256, 256
          %258 = vsyncadd %s251, %s257
          %s259 = smul.addr %s32, 2
          %s260 = sadd.s32 %s255, %s259
          %s261 = smul.addr %s260, 128
          %s262 = scalar_lea.hbm %s2, %s261
          %s263 = sshll.u32 %s254, 4
          %s264 = int_to_ptr.vmem [resolvable:$true] %s263
          %269 = dma.hbm_to_vmem [thread:$0]  %s262, 256, %s264, %s251, 128, 128, 8
        $region24: #{tpu_custom_call.1} parent=15 // pred_fallthru
          _
        // Predicated region
        $region25: #{tpu_custom_call.1} parent=15 // pred_check
          %p270 = pneg %p115
        $region26: #{tpu_custom_call.1} parent=15 // pred_check_branch
          %272 = sbr.rel (%p270) target = $region28
        $region27: #{tpu_custom_call.1} parent=15 // pred_region
          %s273 = sand.u32 %s25, 1
          %s274 = scalar_lea.sflag [#allocation8], %s273
          %s275 = sand.u32 %s105, 1
          %s276 = smul.addr %s275, 16
          %s277 = scalar_lea.vmem [#allocation9], %s276
          %s278 = smul.u32 2, %s33
          %s280 = ssub.s32 256, 256
          %281 = vsyncadd %s274, %s280
          %s282 = smul.addr %s32, 2
          %s283 = sadd.s32 %s278, %s282
          %s284 = smul.addr %s283, 128
          %s285 = scalar_lea.hbm %s3, %s284
          %s286 = sshll.u32 %s277, 4
          %s287 = int_to_ptr.vmem [resolvable:$true] %s286
          %292 = dma.hbm_to_vmem [thread:$0]  %s285, 256, %s287, %s274, 128, 128, 8
        $region28: #{tpu_custom_call.1} parent=15 // pred_fallthru
          _
        // Predicated region
        $region29: #{tpu_custom_call.1} parent=15 // pred_check
          %p293 = pneg %p143
        $region30: #{tpu_custom_call.1} parent=15 // pred_check_branch
          %295 = sbr.rel (%p293) target = $region32
        $region31: #{tpu_custom_call.1} parent=15 // pred_region
          %p296 = scmp.lt.s32.totalorder %s32, 1
          %s297 = scalar_select %p296, %s32, 1
          %p298 = scmp.lt.s32.totalorder %s33, 0
          %s299 = scalar_select %p298, %s33, 0
          %s300 = sadd.s32 %s299, %s297
          %s301 = scalar_lea.vmem %s4, %s300
        $region32: #{tpu_custom_call.1} parent=15 // pred_fallthru
          _
        // Predicated region
        $region33: #{tpu_custom_call.1} parent=15 // pred_check
          %p302 = pneg %p171
        $region34: #{tpu_custom_call.1} parent=15 // pred_check_branch
          %304 = sbr.rel (%p302) target = $region36
        $region35: #{tpu_custom_call.1} parent=15 // pred_region
          %p305 = scmp.lt.s32.totalorder %s32, 1
          %s306 = scalar_select %p305, %s32, 1
          %p307 = scmp.lt.s32.totalorder %s33, 0
          %s308 = scalar_select %p307, %s33, 0
          %s309 = sadd.s32 %s308, %s306
          %s310 = scalar_lea.vmem %s5, %s309
        $region36: #{tpu_custom_call.1} parent=15 // pred_fallthru
          _
      $region16: #{tpu_custom_call.1} parent=5 // pred_fallthru
        _
      %p311 = scmp.le.s32.totalorder 1, %s25
      %p312 = scmp.lt.s32.totalorder %s25, 3
      %p313 = pnand %p311, %p312
      %p314 = pneg %p313
      // Predicated region
      $region37: #{tpu_custom_call.1} parent=5 // pred_check
        _
      $region38: #{tpu_custom_call.1} parent=5 // pred_check_branch
        %316 = sbr.rel (%p313) target = $region40
      $region39: #{tpu_custom_call.1} parent=5 // pred_region
        %s317 = ssub.s32 %s25, 1
        %s318 = sand.u32 %s52, 1
        %s319 = scalar_lea.sflag [#allocation5], %s318
        %s320 = sand.u32 %s52, 1
        %s321 = smul.addr %s320, 16
        %s322 = scalar_lea.vmem [#allocation4], %s321
        // Predicated region
        $region41: #{tpu_custom_call.1} parent=39 // pred_check
          %p323 = pneg %p65
        $region42: #{tpu_custom_call.1} parent=39 // pred_check_branch
          %325 = sbr.rel (%p323) target = $region44
        $region43: #{tpu_custom_call.1} parent=39 // pred_region
          %326 = dma.done %s319, 256
        $region44: #{tpu_custom_call.1} parent=39 // pred_fallthru
          _
        %s327 = sand.u32 %s30, 1
        %s328 = scalar_lea.sflag [#allocation8], %s327
        %s329 = sand.u32 %s80, 1
        %s330 = smul.addr %s329, 16
        %s331 = scalar_lea.vmem [#allocation7], %s330
        // Predicated region
        $region45: #{tpu_custom_call.1} parent=39 // pred_check
          %p332 = pneg %p93
        $region46: #{tpu_custom_call.1} parent=39 // pred_check_branch
          %334 = sbr.rel (%p332) target = $region48
        $region47: #{tpu_custom_call.1} parent=39 // pred_region
          %335 = dma.done %s328, 256
        $region48: #{tpu_custom_call.1} parent=39 // pred_fallthru
          _
        %s336 = sand.u32 %s30, 1
        %s337 = scalar_lea.sflag [#allocation8], %s336
        %s338 = sand.u32 %s108, 1
        %s339 = smul.addr %s338, 16
        %s340 = scalar_lea.vmem [#allocation9], %s339
        // Predicated region
        $region49: #{tpu_custom_call.1} parent=39 // pred_check
          %p341 = pneg %p121
        $region50: #{tpu_custom_call.1} parent=39 // pred_check_branch
          %343 = sbr.rel (%p341) target = $region52
        $region51: #{tpu_custom_call.1} parent=39 // pred_region
          %344 = dma.done %s337, 256
        $region52: #{tpu_custom_call.1} parent=39 // pred_fallthru
          _
        %s345 = sand.u32 %s52, 1
        %s346 = scalar_lea.sflag [#allocation5], %s345
        %s347 = sand.u32 %s52, 1
        %s348 = smul.addr %s347, 16
        %s349 = scalar_lea.vmem [#allocation4], %s348
        %p350 = pneg %p65
        %p351 = pneg %p62
        %s352 = sand.u32 %s30, 1
        %s353 = scalar_lea.sflag [#allocation8], %s352
        %s354 = sand.u32 %s80, 1
        %s355 = smul.addr %s354, 16
        %s356 = scalar_lea.vmem [#allocation7], %s355
        %p357 = pneg %p93
        %p358 = pneg %p90
        %s359 = sand.u32 %s30, 1
        %s360 = scalar_lea.sflag [#allocation8], %s359
        %s361 = sand.u32 %s108, 1
        %s362 = smul.addr %s361, 16
        %s363 = scalar_lea.vmem [#allocation9], %s362
        %p364 = pneg %p121
        %p365 = pneg %p118
        %p366 = scmp.lt.s32.totalorder %s34, 1
        %s367 = scalar_select %p366, %s34, 1
        %p368 = scmp.lt.s32.totalorder %s35, 0
        %s369 = scalar_select %p368, %s35, 0
        %s370 = sadd.s32 %s369, %s367
        %s371 = scalar_lea.vmem %s4, %s370
        %p372 = pneg %p149
        %p373 = pneg %p146
        %p374 = scmp.lt.s32.totalorder %s34, 1
        %s375 = scalar_select %p374, %s34, 1
        %p376 = scmp.lt.s32.totalorder %s35, 0
        %s377 = scalar_select %p376, %s35, 0
        %s378 = sadd.s32 %s377, %s375
        %s379 = scalar_lea.vmem %s5, %s378
        %p380 = pneg %p177
        %p381 = pneg %p174
        %p382 = pneg %p205
        %p383 = pneg %p202
        %s384 = sand.u32 %s192, 1
        %s385 = scalar_lea.sflag [#allocation6], %s384
        %s386 = sand.u32 %s192, 1
        %s387 = smul.addr %s386, 8
        %s388 = scalar_lea.vmem [#allocation10], %s387
        %s389 = smul.u32 2, %s35
        %s390 = smul.u32 2, %s35
        %s391 = smul.u32 2, %s35
        %p392 = scmp.lt.s32.totalorder %s34, 1
        %s393 = scalar_select %p392, %s34, 1
        %p394 = scmp.lt.s32.totalorder %s35, 0
        %s395 = scalar_select %p394, %s35, 0
        %s396 = sadd.s32 %s395, %s393
        %s397 = scalar_lea.vmem %s4, %s396
        %p398 = scmp.lt.s32.totalorder %s34, 1
        %s399 = scalar_select %p398, %s34, 1
        %p400 = scmp.lt.s32.totalorder %s35, 0
        %s401 = scalar_select %p400, %s35, 0
        %s402 = sadd.s32 %s401, %s399
        %s403 = scalar_lea.vmem %s5, %s402
        %s404 = sld [smem:[#allocation3 + %s34]]
        %v405 = vld [vmem:[%s322] sm:$0xff]
        %v406 = vld [vmem:[%s322 + $0x8] sm:$0xff]
        %v407 = vld [vmem:[%s331] sm:$0xff]
        %v408 = vld [vmem:[%s331 + $0x8] sm:$0xff]
        %v409 = vsub.f32 %v407, %v405
        %v410 = vsub.f32 %v408, %v406
        %v411 = vld [vmem:[%s340] sm:$0xff]
        %v412 = vld [vmem:[%s340 + $0x8] sm:$0xff]
        %v413 = vsub.f32 %v411, %v405
        %v414 = vsub.f32 %v412, %v406
        %v415 = vmul.f32 %v409, %v409
        %v416 = vmul.f32 %v410, %v410
        %v417 = vmul.f32 %v413, %v413
        %v418 = vmul.f32 %v414, %v414
        %v419 = vadd.f32 %v415, %v417
        %v420 = vadd.f32 %v416, %v418
        %v421 = vlaneseq
        %v422 = vshrl.u32 %v421, 7
        %v423 = vadd.s32 %v422, 8
        %v424 = vlaneseq
        %v425 = vand.u32 %v424, 127
        %s426 = smul.u32 %s35, 16
        %v427 = vstv %s426
        %v428 = vadd.s32 %v427, %v422
        %v429 = vadd.s32 %v427, %v423
        %v430 = vmul.u32 %v428, 128
        %v431 = vmul.u32 %v429, 128
        %v432 = vadd.s32 %v430, %v425
        %v433 = vadd.s32 %v431, %v425
        %s434 = smul.u32 %s404, 16
        %v435 = vstv %s434
        %vm436 = vcmp.lt.s32.totalorder %v432, %v435
        %vm437 = vcmp.lt.s32.totalorder %v433, %v435
        %v438 = vsel %vm436, 1, 0
        %v439 = vsel %vm437, 1, 0
        %v440 = vcvt.s32.f32 %v438
        %v441 = vcvt.s32.f32 %v439
        %v442 = vmul.f32 %v419, %v440
        %v443 = vmul.f32 %v420, %v441
        %v444 = vadd.f32 %v442, %v443
        %445 = vadd.xlane.f32.xlu0 %v444
        %v446 = vpop.xlane.xlu0 %445
        %v447 = vrot.slane %v446, 4
        %v448 = vadd.f32 %v446, %v447
        %v449 = vrot.slane %v448, 2
        %v450 = vadd.f32 %v448, %v449
        %v451 = vrot.slane %v450, 1
        %v452 = vadd.f32 %v450, %v451
        %s453 = vtos %v452
        %v454 = vld [vmem:[%s397] sm:$0x1]
        %v455 = vld [vmem:[%s403] sm:$0x1]
        %s456 = smul.u32 %s35, 128
        %v457 = vstv %s456
        %v458 = vadd.s32 %v425, %v457
        %v459 = vstv %s404
        %vm460 = vcmp.lt.s32.totalorder %v458, %v459
        %v461 = vsel %vm460, 1, 0
        %v462 = vcvt.s32.f32 %v461
        %vm463 = vcmp.eq.f32.partialorder %v455, 1.0
        %v464 = vsel %vm463, 20.0, 1.0
        %v465 = vmax.f32 %v454, 0.0
        %v466 = vmul.f32 %v454, %v455
        %v467 = vsub.f32 %v465, %v466
        %v468 = vand.u32 2147483647, %v454
        %v469 = vsub.f32 0.0, %v468
        %v470 = vmul.f32 %v469, 1.442695
        %v471 = vpow.pop %v470
        %v472 = vadd.f32 %v471, 1.0
        %v473 = vlog2.pop %v472
        %v474 = vmul.f32 %v473, 0.6931472
        %v475 = vmul.f32 -0.5, %v471
        %v476 = vadd.f32 %v475, 1.0
        %v477 = vmul.f32 %v476, %v471
        %v478 = vand.u32 2147483647, %v471
        %vm479 = vcmp.lt.f32.partialorder %v478, 0.0004427343
        %v480 = vsel %vm479, %v477, %v474
        %v481 = vadd.f32 %v467, %v480
        %v482 = vmul.f32 %v462, %v464
        %v483 = vmul.f32 %v482, %v481
        %vm484 = vcmask 1040384
        %v485 = vsel %vm484, %v483, 0.0
        %486 = vadd.xlane.f32.xlu0 %v485
        %v487 = vpop.xlane.xlu0 %486
        %v488 = vrot.slane %v487, 4
        %v489 = vadd.f32 %v487, %v488
        %v490 = vrot.slane %v489, 2
        %v491 = vadd.f32 %v489, %v490
        %v492 = vrot.slane %v491, 1
        %v493 = vadd.f32 %v491, %v492
        %s494 = vtos %v493
        %vm495 = vcmp.eq.s32.totalorder %v422, 0
        %v496 = vstv %s453
        %v497 = vstv %s494
        %v498 = vsel %vm495, %v496, %v497
        %499 = vst [vmem:[%s388] sm:$0xff] %v498
        %s500 = sand.u32 %s192, 1
        %s501 = scalar_lea.sflag [#allocation6], %s500
        %s502 = sand.u32 %s192, 1
        %s503 = smul.addr %s502, 8
        %s504 = scalar_lea.vmem [#allocation10], %s503
        // Predicated region
        $region53: #{tpu_custom_call.1} parent=39 // pred_check
          %p505 = pneg %p202
        $region54: #{tpu_custom_call.1} parent=39 // pred_check_branch
          %507 = sbr.rel (%p505) target = $region56
        $region55: #{tpu_custom_call.1} parent=39 // pred_region
          %s509 = ssub.s32 128, 128
          %510 = vsyncadd %s501, %s509
          %s511 = sadd.s32 %s35, %s34
          %s512 = smul.addr %s511, 128
          %s513 = scalar_lea.hbm %s6, %s512
          %s515 = sshll.u32 %s504, 4
          %s516 = int_to_ptr.vmem [resolvable:$true] %s515
          %518 = dma.vmem_to_hbm [thread:$0]  %s516, 128, %s513, %s501
        $region56: #{tpu_custom_call.1} parent=39 // pred_fallthru
          _
      $region40: #{tpu_custom_call.1} parent=5 // pred_fallthru
        _
      %p519 = scmp.le.s32.totalorder 2, %s25
      // Predicated region
      $region57: #{tpu_custom_call.1} parent=5 // pred_check
        %p520 = pneg %p519
      $region58: #{tpu_custom_call.1} parent=5 // pred_check_branch
        %522 = sbr.rel (%p520) target = $region60
      $region59: #{tpu_custom_call.1} parent=5 // pred_region
        %s523 = ssub.s32 %s25, 2
        // Predicated region
        $region61: #{tpu_custom_call.1} parent=59 // pred_check
          %p524 = pneg %p208
        $region62: #{tpu_custom_call.1} parent=59 // pred_check_branch
          %526 = sbr.rel (%p524) target = $region64
        $region63: #{tpu_custom_call.1} parent=59 // pred_region
          %s527 = sand.u32 %s193, 1
          %s528 = scalar_lea.sflag [#allocation6], %s527
          %s529 = sand.u32 %s193, 1
          %s530 = smul.addr %s529, 8
          %s531 = scalar_lea.vmem [#allocation10], %s530
          %532 = dma.done %s528, 128
        $region64: #{tpu_custom_call.1} parent=59 // pred_fallthru
          _
      $region60: #{tpu_custom_call.1} parent=5 // pred_fallthru
        _
    $region6: #{tpu_custom_call.1} parent=1 // loop_footer
      %s29 = sadd.s32 1, %s25
    $region7: #{tpu_custom_call.1} parent=1 // loop_footer_branch
      %24 = sbr.rel target = $region3
    $region8: #{tpu_custom_call.1} parent=1 // loop_exit
      _
    %533 = vsyncpa [#allocation5], 1
    %s534 = scalar_lea.sflag [#allocation5], 1
    %535 = vsyncpa %s534, 1
    %536 = vsyncpa [#allocation8], 1
    %s537 = scalar_lea.sflag [#allocation8], 1
    %538 = vsyncpa %s537, 1
    %539 = vsyncpa [#allocation6], 1
    %s540 = scalar_lea.sflag [#allocation6], 1
    %541 = vsyncpa %s540, 1

</llo_original>
